<compile_context>
chip_gen: v7x
topology: tpu7x:2x2x1
jax: 0.10.0
libtpu: 0.0.40
codegen_flags: <defaults>
</compile_context>

<pallas_src>
import functools

import jax
import jax.numpy as jnp
from jax.experimental import pallas as pl
from jax.experimental.pallas import tpu as pltpu


def _cam_kernel(x_ref, weff_ref, bias_ref, wmlp_ref,
                out_ref, logits_ref, heat_ref, *, c_in, inv_hw):
    """One grid step == `nb` images.

    x_ref:      (nb, C, HW)  VMEM  input slab (channels on sublanes, pixels on lanes)
    weff_ref:   (C, C)       SMEM  fused 1x1-conv weight (attention folded in)
    bias_ref:   (C,)         SMEM  conv bias
    wmlp_ref:   (2, C)       SMEM  row 0 = mlp_gap.weight, row 1 = mlp_gmp.weight
    out_ref:    (nb, C, HW)  VMEM  ReLU(conv) output
    logits_ref: (nb, 1, 2)   VMEM  [gap_logit, gmp_logit] per image
    heat_ref:   (nb, 1, HW)  VMEM  channel-summed heatmap
    """
    nb = x_ref.shape[0]
    hw = x_ref.shape[2]

    # Load each input-channel plane exactly once; keep VPU math in f32
    # (v5e has no bf16 VALU; on v6e/v7x the upcast is cheap at this size).
    xc = [x_ref[:, c, :].astype(jnp.float32) for c in range(c_in)]   # each (nb, hw)

    # ---- GAP / GMP logits: VPU multiply + XLU lane-reduce, no MXU, no per-image concat.
    gl = jnp.zeros((nb, 1), jnp.float32)
    ml = jnp.zeros((nb, 1), jnp.float32)
    for c in range(c_in):
        mean_c = jnp.sum(xc[c], axis=1, keepdims=True) * inv_hw       # (nb, 1)
        max_c = jnp.max(xc[c], axis=1, keepdims=True)                 # (nb, 1)
        gl = gl + mean_c * wmlp_ref[0, c]
        ml = ml + max_c * wmlp_ref[1, c]
    logits_ref[:, 0, :] = jnp.concatenate([gl, ml], axis=1).astype(logits_ref.dtype)

    # ---- fused (attention * x) -> 1x1 conv -> bias -> ReLU via unrolled VPU FMA.
    heat = jnp.zeros((nb, hw), jnp.float32)
    for o in range(c_in):
        acc = xc[0] * weff_ref[o, 0] + bias_ref[o]                    # (nb, hw)
        for c in range(1, c_in):
            acc = acc + xc[c] * weff_ref[o, c]
        acc = jnp.maximum(acc, 0.0)                                   # ReLU
        out_ref[:, o, :] = acc.astype(out_ref.dtype)
        heat = heat + acc

    # ---- heatmap = sum over output channels of the activated output.
    heat_ref[:, 0, :] = heat.astype(heat_ref.dtype)


def _pick_images_per_step(B, C, HW, itemsize, vmem_budget_bytes=8 * 1024 * 1024):
    """Images packed per grid step: as many as a small VMEM budget allows, keeping
    >= 2 balanced grid steps (megacore) once the batch is big enough."""
    # input + output + heat blocks, f32 upper bound, double-buffered.
    per_img = (2 * C + 1) * HW * max(itemsize, 4) * 2
    nb = max(1, min(B, vmem_budget_bytes // max(per_img, 1)))
    if B >= 4:
        nb = min(nb, B // 2)
    # Largest divisor of B not exceeding nb (avoid ragged last block).
    while B % nb:
        nb -= 1
    return nb


def cam_forward(x, w_gap, w_gmp, w_conv, b_conv, *, images_per_step=None):
    """CAM forward pass (act=ReLU, spectral_norm=False).

    x:      (B, C, H, W)   NCHW input
    w_gap:  (1, C)         mlp_gap.weight
    w_gmp:  (1, C)         mlp_gmp.weight
    w_conv: (C, 2C, 1, 1)  cam_conv.weight
    b_conv: (C,)           cam_conv.bias
    Returns (out (B,C,H,W), cam_logits (B,2), heatmap (B,1,H,W)).
    """
    B, C, H, W = x.shape
    HW = H * W

    # Fold the per-channel attention scaling + channel concat into the 1x1 conv.
    wc = w_conv.reshape(C, 2 * C).astype(jnp.float32)
    w_eff = wc[:, :C] * w_gap.reshape(1, C) + wc[:, C:] * w_gmp.reshape(1, C)   # (C, C)
    bias = b_conv.reshape(C).astype(jnp.float32)                                # (C,)
    w_mlp = jnp.concatenate(
        [w_gap.reshape(1, C), w_gmp.reshape(1, C)], axis=0).astype(jnp.float32)  # (2, C)

    x3 = x.reshape(B, C, HW)                       # free reshape, stays NCHW order

    nb = images_per_step if images_per_step is not None else _pick_images_per_step(
        B, C, HW, x.dtype.itemsize)
    grid = (B // nb,)

    smem_spec = pl.BlockSpec(memory_space=pltpu.MemorySpace.SMEM)
    kernel = functools.partial(_cam_kernel, c_in=C, inv_hw=1.0 / HW)

    out3, logits3, heat3 = pl.pallas_call(
        kernel,
        out_shape=(
            jax.ShapeDtypeStruct((B, C, HW), x.dtype),
            jax.ShapeDtypeStruct((B, 1, 2), jnp.float32),
            jax.ShapeDtypeStruct((B, 1, HW), x.dtype),
        ),
        grid=grid,
        in_specs=[
            pl.BlockSpec((nb, C, HW), lambda b: (b, 0, 0)),
            smem_spec,    # w_eff  (C, C)
            smem_spec,    # bias   (C,)
            smem_spec,    # w_mlp  (2, C)
        ],
        out_specs=(
            pl.BlockSpec((nb, C, HW), lambda b: (b, 0, 0)),
            pl.BlockSpec((nb, 1, 2), lambda b: (b, 0, 0)),
            pl.BlockSpec((nb, 1, HW), lambda b: (b, 0, 0)),
        ),
        compiler_params=pltpu.CompilerParams(
            dimension_semantics=("parallel",)),
    )(x3, w_eff, bias, w_mlp)

    out = out3.reshape(B, C, H, W)
    cam_logits = logits3.reshape(B, 2)
    heatmap = heat3.reshape(B, 1, H, W)
    return out, cam_logits, heatmap


def _reference(x, w_gap, w_gmp, w_conv, b_conv):
    """Pure-JAX transcription of the PyTorch CAM.forward."""
    B, C, H, W = x.shape
    gap = jnp.mean(x, axis=(2, 3))                           # (B, C)
    gap_logits = gap @ w_gap.T                               # (B, 1)
    gap_t = x * w_gap.reshape(1, C, 1, 1)
    gmp = jnp.max(x, axis=(2, 3))                            # (B, C)
    gmp_logits = gmp @ w_gmp.T                               # (B, 1)
    gmp_t = x * w_gmp.reshape(1, C, 1, 1)
    cam_logits = jnp.concatenate([gap_logits, gmp_logits], axis=1)
    y = jnp.concatenate([gap_t, gmp_t], axis=1)              # (B, 2C, H, W)
    out = jax.lax.conv_general_dilated(
        y, w_conv, (1, 1), "VALID",
        dimension_numbers=("NCHW", "OIHW", "NCHW"))
    out = out + b_conv.reshape(1, C, 1, 1)
    out = jnp.maximum(out, 0.0)
    heatmap = jnp.sum(out, axis=1, keepdims=True)
    return out, cam_logits, heatmap


if __name__ == "__main__":
    # CAM(in_channels=4), batch=2, spatial 16x16.
    B, C, H, W = 2, 4, 16, 16

    key = jax.random.PRNGKey(0)
    kx, k1, k2, k3, k4 = jax.random.split(key, 5)
    x = jax.random.normal(kx, (B, C, H, W), jnp.float32)
    w_gap = jax.random.normal(k1, (1, C), jnp.float32) * 0.3
    w_gmp = jax.random.normal(k2, (1, C), jnp.float32) * 0.3
    w_conv = jax.random.normal(k3, (C, 2 * C, 1, 1), jnp.float32) * 0.2
    b_conv = jax.random.normal(k4, (C,), jnp.float32) * 0.1

    out, cam_logits, heatmap = cam_forward(x, w_gap, w_gmp, w_conv, b_conv)
    out = jax.block_until_ready(out)

    ref_out, ref_logits, ref_heat = _reference(x, w_gap, w_gmp, w_conv, b_conv)
    assert out.shape == (B, C, H, W)
    assert cam_logits.shape == (B, 2)
    assert heatmap.shape == (B, 1, H, W)
    assert jnp.allclose(out, ref_out, atol=1e-4, rtol=1e-4), "out mismatch"
    assert jnp.allclose(cam_logits, ref_logits, atol=1e-4, rtol=1e-4), "logits mismatch"
    assert jnp.allclose(heatmap, ref_heat, atol=1e-4, rtol=1e-4), "heatmap mismatch"

    print("KERNEL_OK")
</pallas_src>

<mosaic_0001>
module attributes {stable_mosaic.version = 11 : i64} {
  func.func @_cam_kernel(%arg0: i32, %arg1: memref<2x4x256xf32, #tpu.memory_space<vmem>>, %arg2: memref<4x4xf32, #tpu.memory_space<smem>>, %arg3: memref<4xf32, #tpu.memory_space<smem>>, %arg4: memref<2x4xf32, #tpu.memory_space<smem>>, %arg5: memref<2x4x256xf32, #tpu.memory_space<vmem>>, %arg6: memref<2x1x2xf32, #tpu.memory_space<vmem>>, %arg7: memref<2x1x256xf32, #tpu.memory_space<vmem>>) attributes {dimension_semantics = [#tpu.dimension_semantics<parallel>], iteration_bounds = array<i64: 1>, scalar_prefetch = 0 : i64, scratch_operands = 0 : i64, tpu.core_type = #tpu.core_type<tc>, window_params = [{transform_indices = @transform_0, window_bounds = array<i64: 2, 4, 256>}, {transform_indices = @transform_1, window_bounds = array<i64: 4, 4>}, {transform_indices = @transform_2, window_bounds = array<i64: 4>}, {transform_indices = @transform_3, window_bounds = array<i64: 2, 4>}, {transform_indices = @transform_4, window_bounds = array<i64: 2, 4, 256>}, {transform_indices = @transform_5, window_bounds = array<i64: 2, 1, 2>}, {transform_indices = @transform_6, window_bounds = array<i64: 2, 1, 256>}]} {
    %c0 = arith.constant 0 : index
    %c0_0 = arith.constant 0 : index
    %c0_1 = arith.constant 0 : index
    %0 = vector.load %arg1[%c0, %c0_0, %c0_1] : memref<2x4x256xf32, #tpu.memory_space<vmem>>, vector<2x1x256xf32>
    %1 = vector.shape_cast %0 : vector<2x1x256xf32> to vector<2x256xf32>
    %c0_2 = arith.constant 0 : index
    %c1 = arith.constant 1 : index
    %c0_3 = arith.constant 0 : index
    %2 = vector.load %arg1[%c0_2, %c1, %c0_3] : memref<2x4x256xf32, #tpu.memory_space<vmem>>, vector<2x1x256xf32>
    %3 = vector.shape_cast %2 : vector<2x1x256xf32> to vector<2x256xf32>
    %c0_4 = arith.constant 0 : index
    %c2 = arith.constant 2 : index
    %c0_5 = arith.constant 0 : index
    %4 = vector.load %arg1[%c0_4, %c2, %c0_5] : memref<2x4x256xf32, #tpu.memory_space<vmem>>, vector<2x1x256xf32>
    %5 = vector.shape_cast %4 : vector<2x1x256xf32> to vector<2x256xf32>
    %c0_6 = arith.constant 0 : index
    %c3 = arith.constant 3 : index
    %c0_7 = arith.constant 0 : index
    %6 = vector.load %arg1[%c0_6, %c3, %c0_7] : memref<2x4x256xf32, #tpu.memory_space<vmem>>, vector<2x1x256xf32>
    %7 = vector.shape_cast %6 : vector<2x1x256xf32> to vector<2x256xf32>
    %cst = arith.constant 0.000000e+00 : f32
    %8 = vector.broadcast %cst : f32 to vector<2x1xf32>
    %cst_8 = arith.constant 0.000000e+00 : f32
    %9 = vector.broadcast %cst_8 : f32 to vector<2x1xf32>
    %cst_9 = arith.constant dense<0.000000e+00> : vector<2xf32>
    %10 = vector.multi_reduction <add>, %1, %cst_9 [1] : vector<2x256xf32> to vector<2xf32>
    %11 = vector.shape_cast %10 : vector<2xf32> to vector<2x1xf32>
    %cst_10 = arith.constant 3.906250e-03 : f32
    %12 = vector.broadcast %cst_10 : f32 to vector<2x1xf32>
    %13 = arith.mulf %11, %12 : vector<2x1xf32>
    %cst_11 = arith.constant dense<0xFF800000> : vector<2xf32>
    %14 = vector.multi_reduction <maximumf>, %1, %cst_11 [1] : vector<2x256xf32> to vector<2xf32>
    %15 = vector.shape_cast %14 : vector<2xf32> to vector<2x1xf32>
    %c0_12 = arith.constant 0 : index
    %c0_13 = arith.constant 0 : index
    %16 = memref.load %arg4[%c0_12, %c0_13] : memref<2x4xf32, #tpu.memory_space<smem>>
    %17 = vector.broadcast %16 : f32 to vector<2x1xf32>
    %18 = arith.mulf %13, %17 : vector<2x1xf32>
    %19 = arith.addf %8, %18 : vector<2x1xf32>
    %c1_14 = arith.constant 1 : index
    %c0_15 = arith.constant 0 : index
    %20 = memref.load %arg4[%c1_14, %c0_15] : memref<2x4xf32, #tpu.memory_space<smem>>
    %21 = vector.broadcast %20 : f32 to vector<2x1xf32>
    %22 = arith.mulf %15, %21 : vector<2x1xf32>
    %23 = arith.addf %9, %22 : vector<2x1xf32>
    %cst_16 = arith.constant dense<0.000000e+00> : vector<2xf32>
    %24 = vector.multi_reduction <add>, %3, %cst_16 [1] : vector<2x256xf32> to vector<2xf32>
    %25 = vector.shape_cast %24 : vector<2xf32> to vector<2x1xf32>
    %cst_17 = arith.constant 3.906250e-03 : f32
    %26 = vector.broadcast %cst_17 : f32 to vector<2x1xf32>
    %27 = arith.mulf %25, %26 : vector<2x1xf32>
    %cst_18 = arith.constant dense<0xFF800000> : vector<2xf32>
    %28 = vector.multi_reduction <maximumf>, %3, %cst_18 [1] : vector<2x256xf32> to vector<2xf32>
    %29 = vector.shape_cast %28 : vector<2xf32> to vector<2x1xf32>
    %c0_19 = arith.constant 0 : index
    %c1_20 = arith.constant 1 : index
    %30 = memref.load %arg4[%c0_19, %c1_20] : memref<2x4xf32, #tpu.memory_space<smem>>
    %31 = vector.broadcast %30 : f32 to vector<2x1xf32>
    %32 = arith.mulf %27, %31 : vector<2x1xf32>
    %33 = arith.addf %19, %32 : vector<2x1xf32>
    %c1_21 = arith.constant 1 : index
    %c1_22 = arith.constant 1 : index
    %34 = memref.load %arg4[%c1_21, %c1_22] : memref<2x4xf32, #tpu.memory_space<smem>>
    %35 = vector.broadcast %34 : f32 to vector<2x1xf32>
    %36 = arith.mulf %29, %35 : vector<2x1xf32>
    %37 = arith.addf %23, %36 : vector<2x1xf32>
    %cst_23 = arith.constant dense<0.000000e+00> : vector<2xf32>
    %38 = vector.multi_reduction <add>, %5, %cst_23 [1] : vector<2x256xf32> to vector<2xf32>
    %39 = vector.shape_cast %38 : vector<2xf32> to vector<2x1xf32>
    %cst_24 = arith.constant 3.906250e-03 : f32
    %40 = vector.broadcast %cst_24 : f32 to vector<2x1xf32>
    %41 = arith.mulf %39, %40 : vector<2x1xf32>
    %cst_25 = arith.constant dense<0xFF800000> : vector<2xf32>
    %42 = vector.multi_reduction <maximumf>, %5, %cst_25 [1] : vector<2x256xf32> to vector<2xf32>
    %43 = vector.shape_cast %42 : vector<2xf32> to vector<2x1xf32>
    %c0_26 = arith.constant 0 : index
    %c2_27 = arith.constant 2 : index
    %44 = memref.load %arg4[%c0_26, %c2_27] : memref<2x4xf32, #tpu.memory_space<smem>>
    %45 = vector.broadcast %44 : f32 to vector<2x1xf32>
    %46 = arith.mulf %41, %45 : vector<2x1xf32>
    %47 = arith.addf %33, %46 : vector<2x1xf32>
    %c1_28 = arith.constant 1 : index
    %c2_29 = arith.constant 2 : index
    %48 = memref.load %arg4[%c1_28, %c2_29] : memref<2x4xf32, #tpu.memory_space<smem>>
    %49 = vector.broadcast %48 : f32 to vector<2x1xf32>
    %50 = arith.mulf %43, %49 : vector<2x1xf32>
    %51 = arith.addf %37, %50 : vector<2x1xf32>
    %cst_30 = arith.constant dense<0.000000e+00> : vector<2xf32>
    %52 = vector.multi_reduction <add>, %7, %cst_30 [1] : vector<2x256xf32> to vector<2xf32>
    %53 = vector.shape_cast %52 : vector<2xf32> to vector<2x1xf32>
    %cst_31 = arith.constant 3.906250e-03 : f32
    %54 = vector.broadcast %cst_31 : f32 to vector<2x1xf32>
    %55 = arith.mulf %53, %54 : vector<2x1xf32>
    %cst_32 = arith.constant dense<0xFF800000> : vector<2xf32>
    %56 = vector.multi_reduction <maximumf>, %7, %cst_32 [1] : vector<2x256xf32> to vector<2xf32>
    %57 = vector.shape_cast %56 : vector<2xf32> to vector<2x1xf32>
    %c0_33 = arith.constant 0 : index
    %c3_34 = arith.constant 3 : index
    %58 = memref.load %arg4[%c0_33, %c3_34] : memref<2x4xf32, #tpu.memory_space<smem>>
    %59 = vector.broadcast %58 : f32 to vector<2x1xf32>
    %60 = arith.mulf %55, %59 : vector<2x1xf32>
    %61 = arith.addf %47, %60 : vector<2x1xf32>
    %c1_35 = arith.constant 1 : index
    %c3_36 = arith.constant 3 : index
    %62 = memref.load %arg4[%c1_35, %c3_36] : memref<2x4xf32, #tpu.memory_space<smem>>
    %63 = vector.broadcast %62 : f32 to vector<2x1xf32>
    %64 = arith.mulf %57, %63 : vector<2x1xf32>
    %65 = arith.addf %51, %64 : vector<2x1xf32>
    %66 = tpu.concatenate %61, %65 in 1 : vector<2x1xf32>, vector<2x1xf32> -> vector<2x2xf32>
    %c0_37 = arith.constant 0 : index
    %c0_38 = arith.constant 0 : index
    %c0_39 = arith.constant 0 : index
    %67 = vector.load %arg6[%c0_37, %c0_38, %c0_39] : memref<2x1x2xf32, #tpu.memory_space<vmem>>, vector<2x1x2xf32>
    %68 = vector.shape_cast %67 : vector<2x1x2xf32> to vector<2x2xf32>
    %69 = vector.shape_cast %66 : vector<2x2xf32> to vector<2x1x2xf32>
    tpu.vector_store %arg6[%c0_37, %c0_38, %c0_39], %69 {strides = array<i32>} : memref<2x1x2xf32, #tpu.memory_space<vmem>>, vector<2x1x2xf32>,
    %cst_40 = arith.constant 0.000000e+00 : f32
    %70 = vector.broadcast %cst_40 : f32 to vector<2x256xf32>
    %c0_41 = arith.constant 0 : index
    %c0_42 = arith.constant 0 : index
    %71 = memref.load %arg2[%c0_41, %c0_42] : memref<4x4xf32, #tpu.memory_space<smem>>
    %72 = vector.broadcast %71 : f32 to vector<2x256xf32>
    %73 = arith.mulf %1, %72 : vector<2x256xf32>
    %c0_43 = arith.constant 0 : index
    %74 = memref.load %arg3[%c0_43] : memref<4xf32, #tpu.memory_space<smem>>
    %75 = vector.broadcast %74 : f32 to vector<2x256xf32>
    %76 = arith.addf %73, %75 : vector<2x256xf32>
    %c0_44 = arith.constant 0 : index
    %c1_45 = arith.constant 1 : index
    %77 = memref.load %arg2[%c0_44, %c1_45] : memref<4x4xf32, #tpu.memory_space<smem>>
    %78 = vector.broadcast %77 : f32 to vector<2x256xf32>
    %79 = arith.mulf %3, %78 : vector<2x256xf32>
    %80 = arith.addf %76, %79 : vector<2x256xf32>
    %c0_46 = arith.constant 0 : index
    %c2_47 = arith.constant 2 : index
    %81 = memref.load %arg2[%c0_46, %c2_47] : memref<4x4xf32, #tpu.memory_space<smem>>
    %82 = vector.broadcast %81 : f32 to vector<2x256xf32>
    %83 = arith.mulf %5, %82 : vector<2x256xf32>
    %84 = arith.addf %80, %83 : vector<2x256xf32>
    %c0_48 = arith.constant 0 : index
    %c3_49 = arith.constant 3 : index
    %85 = memref.load %arg2[%c0_48, %c3_49] : memref<4x4xf32, #tpu.memory_space<smem>>
    %86 = vector.broadcast %85 : f32 to vector<2x256xf32>
    %87 = arith.mulf %7, %86 : vector<2x256xf32>
    %88 = arith.addf %84, %87 : vector<2x256xf32>
    %cst_50 = arith.constant 0.000000e+00 : f32
    %89 = vector.broadcast %cst_50 : f32 to vector<2x256xf32>
    %90 = arith.maximumf %88, %89 : vector<2x256xf32>
    %c0_51 = arith.constant 0 : index
    %c0_52 = arith.constant 0 : index
    %c0_53 = arith.constant 0 : index
    %91 = vector.load %arg5[%c0_51, %c0_52, %c0_53] : memref<2x4x256xf32, #tpu.memory_space<vmem>>, vector<2x1x256xf32>
    %92 = vector.shape_cast %91 : vector<2x1x256xf32> to vector<2x256xf32>
    %93 = vector.shape_cast %90 : vector<2x256xf32> to vector<2x1x256xf32>
    tpu.vector_store %arg5[%c0_51, %c0_52, %c0_53], %93 {strides = array<i32>} : memref<2x4x256xf32, #tpu.memory_space<vmem>>, vector<2x1x256xf32>,
    %94 = arith.addf %70, %90 : vector<2x256xf32>
    %c1_54 = arith.constant 1 : index
    %c0_55 = arith.constant 0 : index
    %95 = memref.load %arg2[%c1_54, %c0_55] : memref<4x4xf32, #tpu.memory_space<smem>>
    %96 = vector.broadcast %95 : f32 to vector<2x256xf32>
    %97 = arith.mulf %1, %96 : vector<2x256xf32>
    %c1_56 = arith.constant 1 : index
    %98 = memref.load %arg3[%c1_56] : memref<4xf32, #tpu.memory_space<smem>>
    %99 = vector.broadcast %98 : f32 to vector<2x256xf32>
    %100 = arith.addf %97, %99 : vector<2x256xf32>
    %c1_57 = arith.constant 1 : index
    %c1_58 = arith.constant 1 : index
    %101 = memref.load %arg2[%c1_57, %c1_58] : memref<4x4xf32, #tpu.memory_space<smem>>
    %102 = vector.broadcast %101 : f32 to vector<2x256xf32>
    %103 = arith.mulf %3, %102 : vector<2x256xf32>
    %104 = arith.addf %100, %103 : vector<2x256xf32>
    %c1_59 = arith.constant 1 : index
    %c2_60 = arith.constant 2 : index
    %105 = memref.load %arg2[%c1_59, %c2_60] : memref<4x4xf32, #tpu.memory_space<smem>>
    %106 = vector.broadcast %105 : f32 to vector<2x256xf32>
    %107 = arith.mulf %5, %106 : vector<2x256xf32>
    %108 = arith.addf %104, %107 : vector<2x256xf32>
    %c1_61 = arith.constant 1 : index
    %c3_62 = arith.constant 3 : index
    %109 = memref.load %arg2[%c1_61, %c3_62] : memref<4x4xf32, #tpu.memory_space<smem>>
    %110 = vector.broadcast %109 : f32 to vector<2x256xf32>
    %111 = arith.mulf %7, %110 : vector<2x256xf32>
    %112 = arith.addf %108, %111 : vector<2x256xf32>
    %cst_63 = arith.constant 0.000000e+00 : f32
    %113 = vector.broadcast %cst_63 : f32 to vector<2x256xf32>
    %114 = arith.maximumf %112, %113 : vector<2x256xf32>
    %c0_64 = arith.constant 0 : index
    %c1_65 = arith.constant 1 : index
    %c0_66 = arith.constant 0 : index
    %115 = vector.load %arg5[%c0_64, %c1_65, %c0_66] : memref<2x4x256xf32, #tpu.memory_space<vmem>>, vector<2x1x256xf32>
    %116 = vector.shape_cast %115 : vector<2x1x256xf32> to vector<2x256xf32>
    %117 = vector.shape_cast %114 : vector<2x256xf32> to vector<2x1x256xf32>
    tpu.vector_store %arg5[%c0_64, %c1_65, %c0_66], %117 {strides = array<i32>} : memref<2x4x256xf32, #tpu.memory_space<vmem>>, vector<2x1x256xf32>,
    %118 = arith.addf %94, %114 : vector<2x256xf32>
    %c2_67 = arith.constant 2 : index
    %c0_68 = arith.constant 0 : index
    %119 = memref.load %arg2[%c2_67, %c0_68] : memref<4x4xf32, #tpu.memory_space<smem>>
    %120 = vector.broadcast %119 : f32 to vector<2x256xf32>
    %121 = arith.mulf %1, %120 : vector<2x256xf32>
    %c2_69 = arith.constant 2 : index
    %122 = memref.load %arg3[%c2_69] : memref<4xf32, #tpu.memory_space<smem>>
    %123 = vector.broadcast %122 : f32 to vector<2x256xf32>
    %124 = arith.addf %121, %123 : vector<2x256xf32>
    %c2_70 = arith.constant 2 : index
    %c1_71 = arith.constant 1 : index
    %125 = memref.load %arg2[%c2_70, %c1_71] : memref<4x4xf32, #tpu.memory_space<smem>>
    %126 = vector.broadcast %125 : f32 to vector<2x256xf32>
    %127 = arith.mulf %3, %126 : vector<2x256xf32>
    %128 = arith.addf %124, %127 : vector<2x256xf32>
    %c2_72 = arith.constant 2 : index
    %c2_73 = arith.constant 2 : index
    %129 = memref.load %arg2[%c2_72, %c2_73] : memref<4x4xf32, #tpu.memory_space<smem>>
    %130 = vector.broadcast %129 : f32 to vector<2x256xf32>
    %131 = arith.mulf %5, %130 : vector<2x256xf32>
    %132 = arith.addf %128, %131 : vector<2x256xf32>
    %c2_74 = arith.constant 2 : index
    %c3_75 = arith.constant 3 : index
    %133 = memref.load %arg2[%c2_74, %c3_75] : memref<4x4xf32, #tpu.memory_space<smem>>
    %134 = vector.broadcast %133 : f32 to vector<2x256xf32>
    %135 = arith.mulf %7, %134 : vector<2x256xf32>
    %136 = arith.addf %132, %135 : vector<2x256xf32>
    %cst_76 = arith.constant 0.000000e+00 : f32
    %137 = vector.broadcast %cst_76 : f32 to vector<2x256xf32>
    %138 = arith.maximumf %136, %137 : vector<2x256xf32>
    %c0_77 = arith.constant 0 : index
    %c2_78 = arith.constant 2 : index
    %c0_79 = arith.constant 0 : index
    %139 = vector.load %arg5[%c0_77, %c2_78, %c0_79] : memref<2x4x256xf32, #tpu.memory_space<vmem>>, vector<2x1x256xf32>
    %140 = vector.shape_cast %139 : vector<2x1x256xf32> to vector<2x256xf32>
    %141 = vector.shape_cast %138 : vector<2x256xf32> to vector<2x1x256xf32>
    tpu.vector_store %arg5[%c0_77, %c2_78, %c0_79], %141 {strides = array<i32>} : memref<2x4x256xf32, #tpu.memory_space<vmem>>, vector<2x1x256xf32>,
    %142 = arith.addf %118, %138 : vector<2x256xf32>
    %c3_80 = arith.constant 3 : index
    %c0_81 = arith.constant 0 : index
    %143 = memref.load %arg2[%c3_80, %c0_81] : memref<4x4xf32, #tpu.memory_space<smem>>
    %144 = vector.broadcast %143 : f32 to vector<2x256xf32>
    %145 = arith.mulf %1, %144 : vector<2x256xf32>
    %c3_82 = arith.constant 3 : index
    %146 = memref.load %arg3[%c3_82] : memref<4xf32, #tpu.memory_space<smem>>
    %147 = vector.broadcast %146 : f32 to vector<2x256xf32>
    %148 = arith.addf %145, %147 : vector<2x256xf32>
    %c3_83 = arith.constant 3 : index
    %c1_84 = arith.constant 1 : index
    %149 = memref.load %arg2[%c3_83, %c1_84] : memref<4x4xf32, #tpu.memory_space<smem>>
    %150 = vector.broadcast %149 : f32 to vector<2x256xf32>
    %151 = arith.mulf %3, %150 : vector<2x256xf32>
    %152 = arith.addf %148, %151 : vector<2x256xf32>
    %c3_85 = arith.constant 3 : index
    %c2_86 = arith.constant 2 : index
    %153 = memref.load %arg2[%c3_85, %c2_86] : memref<4x4xf32, #tpu.memory_space<smem>>
    %154 = vector.broadcast %153 : f32 to vector<2x256xf32>
    %155 = arith.mulf %5, %154 : vector<2x256xf32>
    %156 = arith.addf %152, %155 : vector<2x256xf32>
    %c3_87 = arith.constant 3 : index
    %c3_88 = arith.constant 3 : index
    %157 = memref.load %arg2[%c3_87, %c3_88] : memref<4x4xf32, #tpu.memory_space<smem>>
    %158 = vector.broadcast %157 : f32 to vector<2x256xf32>
    %159 = arith.mulf %7, %158 : vector<2x256xf32>
    %160 = arith.addf %156, %159 : vector<2x256xf32>
    %cst_89 = arith.constant 0.000000e+00 : f32
    %161 = vector.broadcast %cst_89 : f32 to vector<2x256xf32>
    %162 = arith.maximumf %160, %161 : vector<2x256xf32>
    %c0_90 = arith.constant 0 : index
    %c3_91 = arith.constant 3 : index
    %c0_92 = arith.constant 0 : index
    %163 = vector.load %arg5[%c0_90, %c3_91, %c0_92] : memref<2x4x256xf32, #tpu.memory_space<vmem>>, vector<2x1x256xf32>
    %164 = vector.shape_cast %163 : vector<2x1x256xf32> to vector<2x256xf32>
    %165 = vector.shape_cast %162 : vector<2x256xf32> to vector<2x1x256xf32>
    tpu.vector_store %arg5[%c0_90, %c3_91, %c0_92], %165 {strides = array<i32>} : memref<2x4x256xf32, #tpu.memory_space<vmem>>, vector<2x1x256xf32>,
    %166 = arith.addf %142, %162 : vector<2x256xf32>
    %c0_93 = arith.constant 0 : index
    %c0_94 = arith.constant 0 : index
    %c0_95 = arith.constant 0 : index
    %167 = vector.load %arg7[%c0_93, %c0_94, %c0_95] : memref<2x1x256xf32, #tpu.memory_space<vmem>>, vector<2x1x256xf32>
    %168 = vector.shape_cast %167 : vector<2x1x256xf32> to vector<2x256xf32>
    %169 = vector.shape_cast %166 : vector<2x256xf32> to vector<2x1x256xf32>
    tpu.vector_store %arg7[%c0_93, %c0_94, %c0_95], %169 {strides = array<i32>} : memref<2x1x256xf32, #tpu.memory_space<vmem>>, vector<2x1x256xf32>,
    return
  }
  func.func @transform_0(%arg0: i32) -> (i32, i32, i32) {
    %c0_i32 = arith.constant 0 : i32
    %c0_i32_0 = arith.constant 0 : i32
    %c0_i32_1 = arith.constant 0 : i32
    return %arg0, %c0_i32, %c0_i32_0 : i32, i32, i32
  }
  func.func @transform_1(%arg0: i32) -> (i32, i32) {
    %c0_i32 = arith.constant 0 : i32
    %c0_i32_0 = arith.constant 0 : i32
    %c0_i32_1 = arith.constant 0 : i32
    return %c0_i32, %c0_i32_0 : i32, i32
  }
  func.func @transform_2(%arg0: i32) -> i32 {
    %c0_i32 = arith.constant 0 : i32
    %c0_i32_0 = arith.constant 0 : i32
    return %c0_i32 : i32
  }
  func.func @transform_3(%arg0: i32) -> (i32, i32) {
    %c0_i32 = arith.constant 0 : i32
    %c0_i32_0 = arith.constant 0 : i32
    %c0_i32_1 = arith.constant 0 : i32
    return %c0_i32, %c0_i32_0 : i32, i32
  }
  func.func @transform_4(%arg0: i32) -> (i32, i32, i32) {
    %c0_i32 = arith.constant 0 : i32
    %c0_i32_0 = arith.constant 0 : i32
    %c0_i32_1 = arith.constant 0 : i32
    return %arg0, %c0_i32, %c0_i32_0 : i32, i32, i32
  }
  func.func @transform_5(%arg0: i32) -> (i32, i32, i32) {
    %c0_i32 = arith.constant 0 : i32
    %c0_i32_0 = arith.constant 0 : i32
    %c0_i32_1 = arith.constant 0 : i32
    return %arg0, %c0_i32, %c0_i32_0 : i32, i32, i32
  }
  func.func @transform_6(%arg0: i32) -> (i32, i32, i32) {
    %c0_i32 = arith.constant 0 : i32
    %c0_i32_0 = arith.constant 0 : i32
    %c0_i32_1 = arith.constant 0 : i32
    return %arg0, %c0_i32, %c0_i32_0 : i32, i32, i32
  }
}

</mosaic_0001>

<llo_original>
// kernel: tpu_custom_call.1
$region0: #{tpu_custom_call.1}
  #allocation0 [shape = 'u32[]', space=smem, size = 0x4, offset = 0x4, fixed_abs, tag = 'smem constant byte address 0x4 - core index']
  #allocation1 [shape = 'u32[144,128]{1,0:T(1,128)}', space=vmem, size = 0x12000, scoped, tag = 'internal scratch']
  %s0 = inlined_call_operand.hbm [shape: f32[2,4,256], index: 0, kind: input, shape index: {}]
  %s1 = inlined_call_operand.hbm [shape: f32[4,4], index: 1, kind: input, shape index: {}]
  %s2 = inlined_call_operand.vmem [shape: f32[4], index: 2, kind: input, shape index: {}]
  %s3 = inlined_call_operand.vmem [shape: f32[2,4], index: 3, kind: input, shape index: {}]
  %s4 = inlined_call_operand.hbm [shape: f32[2,4,256], index: 4, kind: output, shape index: {0}]
  %s5 = inlined_call_operand.hbm [shape: f32[2,1,2], index: 5, kind: output, shape index: {1}]
  %s6 = inlined_call_operand.hbm [shape: f32[2,1,256], index: 6, kind: output, shape index: {2}]
  %7 = xla_tuple %s4, %s5, %s6
  %s8 = sld [smem:[#allocation0]]
  $region58: #{tpu_custom_call.1} parent=0
    _
  %s10 = ssub.s32 1, %s8
  %s11 = scalar_select 0, %s10, %s8
  $region1: #{tpu_custom_call.1} parent=0
    #allocation2 [shape = 'u8[8192]{0}', space=vmem, size = 0x2000, scoped, tag = 'input window, operand 0, single buffered']
    #allocation3 [shape = 's32[1]{0}', space=sflag, size = 0x4, scoped, tag = 'scoped memory for tpu_custom_call.1']
    #allocation4 [shape = 's32[1]{0}', space=sflag, size = 0x4, scoped, tag = 'scoped memory for tpu_custom_call.1']
    #allocation5 [shape = 's32[1]{0}', space=sflag, size = 0x4, scoped, tag = 'scoped memory for tpu_custom_call.1']
    #allocation6 [shape = 's32[1]{0}', space=sflag, size = 0x4, scoped, tag = 'scoped memory for tpu_custom_call.1']
    #allocation7 [shape = 'u8[2048]{0}', space=smem, size = 0x800, scoped, tag = 'input window, operand 1, single buffered']
    #allocation8 [shape = 'u8[512]{0}', space=smem, size = 0x200, scoped, tag = 'input window, operand 2, single buffered']
    #allocation9 [shape = 'u8[1024]{0}', space=smem, size = 0x400, scoped, tag = 'input window, operand 3, single buffered']
    #allocation10 [shape = 's32[1]{0}', space=sflag, size = 0x4, scoped, tag = 'scoped memory for tpu_custom_call.1']
    #allocation11 [shape = 'u8[8192]{0}', space=vmem, size = 0x2000, scoped, tag = 'output window, operand 0, single buffered']
    #allocation12 [shape = 'u8[1024]{0}', space=vmem, size = 0x400, scoped, tag = 'output window, operand 1, single buffered']
    #allocation13 [shape = 's32[1]{0}', space=sflag, size = 0x4, scoped, tag = 'scoped memory for tpu_custom_call.1']
    #allocation14 [shape = 'u8[2048]{0}', space=vmem, size = 0x800, scoped, tag = 'output window, operand 2, single buffered']
    %12 = vsyncpa [#allocation3], 0
    %13 = vsyncpa [#allocation5], 0
    %14 = vsyncpa [#allocation6], 0
    %15 = vsyncpa [#allocation10], 0
    %16 = vsyncpa [#allocation4], 0
    %17 = vsyncpa [#allocation13], 0
    // Predicated region
    $region2: #{tpu_custom_call.1} parent=1 // pred_check
      _
    $region3: #{tpu_custom_call.1} parent=1 // pred_check_branch
      %19 = sbr.rel (0) target = $region5
    $region4: #{tpu_custom_call.1} parent=1 // pred_region
      %s21 = ssub.s32 256, 256
      %22 = vsyncadd [#allocation3], %s21
      %s23 = sshll.u32 [#allocation2], 4
      %s24 = int_to_ptr.vmem [resolvable:$true] %s23
      %29 = dma.hbm_to_vmem [thread:$0]  %s0, 256, %s24, [#allocation3], 128, 128, 8
    $region5: #{tpu_custom_call.1} parent=1 // pred_fallthru
      _
    // Predicated region
    $region6: #{tpu_custom_call.1} parent=1 // pred_check
      _
    $region7: #{tpu_custom_call.1} parent=1 // pred_check_branch
      %31 = sbr.rel (0) target = $region9
    $region8: #{tpu_custom_call.1} parent=1 // pred_region
      %s33 = ssub.s32 64, 64
      %34 = vsyncadd [#allocation5], %s33
      %37 = dma.hbm_to_smem %s1, 64, [#allocation7], [#allocation5]
    $region9: #{tpu_custom_call.1} parent=1 // pred_fallthru
      _
    // Predicated region
    $region10: #{tpu_custom_call.1} parent=1 // pred_check
      _
    $region11: #{tpu_custom_call.1} parent=1 // pred_check_branch
      %39 = sbr.rel (0) target = $region13
    $region12: #{tpu_custom_call.1} parent=1 // pred_region
      %s41 = ssub.s32 16, 16
      %42 = vsyncadd [#allocation6], %s41
      %s44 = sshll.u32 %s2, 4
      %s45 = int_to_ptr.vmem [resolvable:$true] %s44
      %47 = dma.vmem_to_smem %s45, 16, [#allocation8], [#allocation6]
    $region13: #{tpu_custom_call.1} parent=1 // pred_fallthru
      _
    // Predicated region
    $region14: #{tpu_custom_call.1} parent=1 // pred_check
      _
    $region15: #{tpu_custom_call.1} parent=1 // pred_check_branch
      %49 = sbr.rel (0) target = $region17
    $region16: #{tpu_custom_call.1} parent=1 // pred_region
      %s51 = ssub.s32 32, 32
      %52 = vsyncadd [#allocation10], %s51
      %s54 = sshll.u32 %s3, 4
      %s55 = int_to_ptr.vmem [resolvable:$true] %s54
      %57 = dma.vmem_to_smem %s55, 32, [#allocation9], [#allocation10]
    $region17: #{tpu_custom_call.1} parent=1 // pred_fallthru
      _
    // Predicated region
    $region18: #{tpu_custom_call.1} parent=1 // pred_check
      _
    $region19: #{tpu_custom_call.1} parent=1 // pred_check_branch
      %59 = sbr.rel (0) target = $region21
    $region20: #{tpu_custom_call.1} parent=1 // pred_region
      %60 = dma.done [#allocation3], 256
    $region21: #{tpu_custom_call.1} parent=1 // pred_fallthru
      _
    // Predicated region
    $region22: #{tpu_custom_call.1} parent=1 // pred_check
      _
    $region23: #{tpu_custom_call.1} parent=1 // pred_check_branch
      %62 = sbr.rel (0) target = $region25
    $region24: #{tpu_custom_call.1} parent=1 // pred_region
      %63 = dma.done [#allocation5], 64
    $region25: #{tpu_custom_call.1} parent=1 // pred_fallthru
      _
    // Predicated region
    $region26: #{tpu_custom_call.1} parent=1 // pred_check
      _
    $region27: #{tpu_custom_call.1} parent=1 // pred_check_branch
      %65 = sbr.rel (0) target = $region29
    $region28: #{tpu_custom_call.1} parent=1 // pred_region
      %66 = dma.done [#allocation6], 16
    $region29: #{tpu_custom_call.1} parent=1 // pred_fallthru
      _
    // Predicated region
    $region30: #{tpu_custom_call.1} parent=1 // pred_check
      _
    $region31: #{tpu_custom_call.1} parent=1 // pred_check_branch
      %68 = sbr.rel (0) target = $region33
    $region32: #{tpu_custom_call.1} parent=1 // pred_region
      %69 = dma.done [#allocation10], 32
    $region33: #{tpu_custom_call.1} parent=1 // pred_fallthru
      _
    %70 = sfence
    %v71 = vld [vmem:[#allocation2] ss:$4 sm:$0x3]
    %s72 = scalar_lea.vmem [#allocation2], 8
    %v73 = vld [vmem:[%s72] ss:$4 sm:$0x3]
    %s74 = scalar_lea.vmem [#allocation2], 1
    %v75 = vld [vmem:[%s74] ss:$4 sm:$0x3]
    %s76 = scalar_lea.vmem [#allocation2], 9
    %v77 = vld [vmem:[%s76] ss:$4 sm:$0x3]
    %s78 = scalar_lea.vmem [#allocation2], 2
    %v79 = vld [vmem:[%s78] ss:$4 sm:$0x3]
    %s80 = scalar_lea.vmem [#allocation2], 10
    %v81 = vld [vmem:[%s80] ss:$4 sm:$0x3]
    %s82 = scalar_lea.vmem [#allocation2], 3
    %v83 = vld [vmem:[%s82] ss:$4 sm:$0x3]
    %s84 = scalar_lea.vmem [#allocation2], 11
    %v85 = vld [vmem:[%s84] ss:$4 sm:$0x3]
    %v88 = vcombine.low %v71, %v73
    %v90 = vunpack.c.l.s4 1966171168
    %v91 = vunpack.c.0.s8 %v90
    %v92 = vlaneseq
    %v93 = vshrl.u32 %v92, 7
    %v94 = vsub.s32 %v91, %v93
    %v95 = vrot.slane %v88, %v94
    %v96 = vcombine.high %v95, %v95
    %v98 = vunpack.c.l.s4 1966171168
    %v99 = vunpack.c.0.s8 %v98
    %v100 = vlaneseq
    %v101 = vshrl.u32 %v100, 7
    %v102 = vsub.s32 %v99, %v101
    %v103 = vrot.slane %v95, %v102
    %v105 = vunpack.c.l.s4 1966171168
    %v106 = vunpack.c.0.s8 %v105
    %v107 = vlaneseq
    %v108 = vshrl.u32 %v107, 7
    %v109 = vsub.s32 %v106, %v108
    %v110 = vrot.slane %v96, %v109
    %vm113 = vcmask 1041408
    %v114 = vsel %vm113, %v103, 0.0
    %v115 = vsel %vm113, %v110, 0.0
    %v116 = vadd.f32 %v114, %v115
    %117 = vadd.xlane.f32.xlu0 %v116
    %v118 = vpop.xlane.xlu0 %117
    %v119 = vmul.f32 %v118, 0.00390625
    %v120 = vsel %vm113, %v103, -inf
    %v121 = vsel %vm113, %v110, -inf
    %v122 = vmax.f32 %v120, %v121
    %123 = vmax.xlane.f32.xlu0 %v122
    %v124 = vpop.xlane.xlu0 %123
    %s125 = sld [smem:[#allocation9]]
    %v126 = vstv %s125
    %v127 = vmul.f32 %v119, %v126
    %v128 = vadd.f32 %v127, 0.0
    %s129 = sld [smem:[#allocation9 + $0x80]]
    %v130 = vstv %s129
    %v131 = vmul.f32 %v124, %v130
    %v132 = vadd.f32 %v131, 0.0
    %v135 = vcombine.low %v75, %v77
    %v137 = vunpack.c.l.s4 1966171168
    %v138 = vunpack.c.0.s8 %v137
    %v139 = vlaneseq
    %v140 = vshrl.u32 %v139, 7
    %v141 = vsub.s32 %v138, %v140
    %v142 = vrot.slane %v135, %v141
    %v143 = vcombine.high %v142, %v142
    %v145 = vunpack.c.l.s4 1966171168
    %v146 = vunpack.c.0.s8 %v145
    %v147 = vlaneseq
    %v148 = vshrl.u32 %v147, 7
    %v149 = vsub.s32 %v146, %v148
    %v150 = vrot.slane %v142, %v149
    %v152 = vunpack.c.l.s4 1966171168
    %v153 = vunpack.c.0.s8 %v152
    %v154 = vlaneseq
    %v155 = vshrl.u32 %v154, 7
    %v156 = vsub.s32 %v153, %v155
    %v157 = vrot.slane %v143, %v156
    %v160 = vsel %vm113, %v150, 0.0
    %v161 = vsel %vm113, %v157, 0.0
    %v162 = vadd.f32 %v160, %v161
    %163 = vadd.xlane.f32.xlu0 %v162
    %v164 = vpop.xlane.xlu0 %163
    %v165 = vmul.f32 %v164, 0.00390625
    %v166 = vsel %vm113, %v150, -inf
    %v167 = vsel %vm113, %v157, -inf
    %v168 = vmax.f32 %v166, %v167
    %169 = vmax.xlane.f32.xlu0 %v168
    %v170 = vpop.xlane.xlu0 %169
    %s171 = sld [smem:[#allocation9 + $0x1]]
    %v172 = vstv %s171
    %v173 = vmul.f32 %v165, %v172
    %v174 = vadd.f32 %v128, %v173
    %s175 = sld [smem:[#allocation9 + $0x81]]
    %v176 = vstv %s175
    %v177 = vmul.f32 %v170, %v176
    %v178 = vadd.f32 %v132, %v177
    %v181 = vcombine.low %v79, %v81
    %v183 = vunpack.c.l.s4 1966171168
    %v184 = vunpack.c.0.s8 %v183
    %v185 = vlaneseq
    %v186 = vshrl.u32 %v185, 7
    %v187 = vsub.s32 %v184, %v186
    %v188 = vrot.slane %v181, %v187
    %v189 = vcombine.high %v188, %v188
    %v191 = vunpack.c.l.s4 1966171168
    %v192 = vunpack.c.0.s8 %v191
    %v193 = vlaneseq
    %v194 = vshrl.u32 %v193, 7
    %v195 = vsub.s32 %v192, %v194
    %v196 = vrot.slane %v188, %v195
    %v198 = vunpack.c.l.s4 1966171168
    %v199 = vunpack.c.0.s8 %v198
    %v200 = vlaneseq
    %v201 = vshrl.u32 %v200, 7
    %v202 = vsub.s32 %v199, %v201
    %v203 = vrot.slane %v189, %v202
    %v206 = vsel %vm113, %v196, 0.0
    %v207 = vsel %vm113, %v203, 0.0
    %v208 = vadd.f32 %v206, %v207
    %209 = vadd.xlane.f32.xlu0 %v208
    %v210 = vpop.xlane.xlu0 %209
    %v211 = vmul.f32 %v210, 0.00390625
    %v212 = vsel %vm113, %v196, -inf
    %v213 = vsel %vm113, %v203, -inf
    %v214 = vmax.f32 %v212, %v213
    %215 = vmax.xlane.f32.xlu0 %v214
    %v216 = vpop.xlane.xlu0 %215
    %s217 = sld [smem:[#allocation9 + $0x2]]
    %v218 = vstv %s217
    %v219 = vmul.f32 %v211, %v218
    %v220 = vadd.f32 %v174, %v219
    %s221 = sld [smem:[#allocation9 + $0x82]]
    %v222 = vstv %s221
    %v223 = vmul.f32 %v216, %v222
    %v224 = vadd.f32 %v178, %v223
    %v227 = vcombine.low %v83, %v85
    %v229 = vunpack.c.l.s4 1966171168
    %v230 = vunpack.c.0.s8 %v229
    %v231 = vlaneseq
    %v232 = vshrl.u32 %v231, 7
    %v233 = vsub.s32 %v230, %v232
    %v234 = vrot.slane %v227, %v233
    %v235 = vcombine.high %v234, %v234
    %v237 = vunpack.c.l.s4 1966171168
    %v238 = vunpack.c.0.s8 %v237
    %v239 = vlaneseq
    %v240 = vshrl.u32 %v239, 7
    %v241 = vsub.s32 %v238, %v240
    %v242 = vrot.slane %v234, %v241
    %v244 = vunpack.c.l.s4 1966171168
    %v245 = vunpack.c.0.s8 %v244
    %v246 = vlaneseq
    %v247 = vshrl.u32 %v246, 7
    %v248 = vsub.s32 %v245, %v247
    %v249 = vrot.slane %v235, %v248
    %v252 = vsel %vm113, %v242, 0.0
    %v253 = vsel %vm113, %v249, 0.0
    %v254 = vadd.f32 %v252, %v253
    %255 = vadd.xlane.f32.xlu0 %v254
    %v256 = vpop.xlane.xlu0 %255
    %v257 = vmul.f32 %v256, 0.00390625
    %v258 = vsel %vm113, %v242, -inf
    %v259 = vsel %vm113, %v249, -inf
    %v260 = vmax.f32 %v258, %v259
    %261 = vmax.xlane.f32.xlu0 %v260
    %v262 = vpop.xlane.xlu0 %261
    %s263 = sld [smem:[#allocation9 + $0x3]]
    %v264 = vstv %s263
    %v265 = vmul.f32 %v257, %v264
    %v266 = vadd.f32 %v220, %v265
    %s267 = sld [smem:[#allocation9 + $0x83]]
    %v268 = vstv %s267
    %v269 = vmul.f32 %v262, %v268
    %v270 = vadd.f32 %v224, %v269
    %vm271 = vcmask 7168
    %v272 = vsel %vm271, %v266, %v270
    %v275 = vunpack.c.l.s4 1966171168
    %v276 = vunpack.c.0.s8 %v275
    %v277 = vlaneseq
    %v278 = vshrl.u32 %v277, 7
    %v279 = vsub.s32 %v276, %v278
    %v280 = vrot.slane %v272, %v279
    %v281 = vcombine.high %v280, %v280
    %v283 = vunpack.c.l.s4 1966171168
    %v284 = vunpack.c.0.s8 %v283
    %v285 = vlaneseq
    %v286 = vshrl.u32 %v285, 7
    %v287 = vsub.s32 %v284, %v286
    %v288 = vrot.slane %v280, %v287
    %v290 = vunpack.c.l.s4 1966171168
    %v291 = vunpack.c.0.s8 %v290
    %v292 = vlaneseq
    %v293 = vshrl.u32 %v292, 7
    %v294 = vsub.s32 %v291, %v293
    %v295 = vrot.slane %v281, %v294
    %vm298 = vcmask 8192
    %299 = vst.msk [vmem:[#allocation12] sm:$0x1] %vm298, %v288
    %300 = vst.msk [vmem:[#allocation12 + $0x1] sm:$0x1] %vm298, %v295
    %s301 = sld [smem:[#allocation7]]
    %v302 = vstv %s301
    %v303 = vmul.f32 %v71, %v302
    %v304 = vmul.f32 %v73, %v302
    %s305 = sld [smem:[#allocation8]]
    %v306 = vstv %s305
    %v307 = vadd.f32 %v303, %v306
    %v308 = vadd.f32 %v304, %v306
    %s309 = sld [smem:[#allocation7 + $0x1]]
    %v310 = vstv %s309
    %v311 = vmul.f32 %v75, %v310
    %v312 = vmul.f32 %v77, %v310
    %v313 = vadd.f32 %v307, %v311
    %v314 = vadd.f32 %v308, %v312
    %s315 = sld [smem:[#allocation7 + $0x2]]
    %v316 = vstv %s315
    %v317 = vmul.f32 %v79, %v316
    %v318 = vmul.f32 %v81, %v316
    %v319 = vadd.f32 %v313, %v317
    %v320 = vadd.f32 %v314, %v318
    %s321 = sld [smem:[#allocation7 + $0x3]]
    %v322 = vstv %s321
    %v323 = vmul.f32 %v83, %v322
    %v324 = vmul.f32 %v85, %v322
    %v325 = vadd.f32 %v319, %v323
    %v326 = vadd.f32 %v320, %v324
    %v327 = vmax.f32 %v325, 0.0
    %v328 = vmax.f32 %v326, 0.0
    %v329 = vlaneseq
    %vm330 = vcmp.ge.s32.totalorder %v329, 0
    %vm331 = vcmp.lt.s32.totalorder %v329, 256
    %vm332 = vmand %vm330, %vm331
    %333 = vst.msk [vmem:[#allocation11] ss:$4 sm:$0x3] %vm332, %v327
    %s334 = scalar_lea.vmem [#allocation11], 8
    %335 = vst.msk [vmem:[%s334] ss:$4 sm:$0x3] %vm332, %v328
    %v336 = vadd.f32 %v327, 0.0
    %v337 = vadd.f32 %v328, 0.0
    %s338 = sld [smem:[#allocation7 + $0x80]]
    %v339 = vstv %s338
    %v340 = vmul.f32 %v71, %v339
    %v341 = vmul.f32 %v73, %v339
    %s342 = sld [smem:[#allocation8 + $0x1]]
    %v343 = vstv %s342
    %v344 = vadd.f32 %v340, %v343
    %v345 = vadd.f32 %v341, %v343
    %s346 = sld [smem:[#allocation7 + $0x81]]
    %v347 = vstv %s346
    %v348 = vmul.f32 %v75, %v347
    %v349 = vmul.f32 %v77, %v347
    %v350 = vadd.f32 %v344, %v348
    %v351 = vadd.f32 %v345, %v349
    %s352 = sld [smem:[#allocation7 + $0x82]]
    %v353 = vstv %s352
    %v354 = vmul.f32 %v79, %v353
    %v355 = vmul.f32 %v81, %v353
    %v356 = vadd.f32 %v350, %v354
    %v357 = vadd.f32 %v351, %v355
    %s358 = sld [smem:[#allocation7 + $0x83]]
    %v359 = vstv %s358
    %v360 = vmul.f32 %v83, %v359
    %v361 = vmul.f32 %v85, %v359
    %v362 = vadd.f32 %v356, %v360
    %v363 = vadd.f32 %v357, %v361
    %v364 = vmax.f32 %v362, 0.0
    %v365 = vmax.f32 %v363, 0.0
    %s366 = scalar_lea.vmem [#allocation11], 1
    %367 = vst.msk [vmem:[%s366] ss:$4 sm:$0x3] %vm332, %v364
    %s368 = scalar_lea.vmem [#allocation11], 9
    %369 = vst.msk [vmem:[%s368] ss:$4 sm:$0x3] %vm332, %v365
    %v370 = vadd.f32 %v336, %v364
    %v371 = vadd.f32 %v337, %v365
    %s372 = sld [smem:[#allocation7 + $0x100]]
    %v373 = vstv %s372
    %v374 = vmul.f32 %v71, %v373
    %v375 = vmul.f32 %v73, %v373
    %s376 = sld [smem:[#allocation8 + $0x2]]
    %v377 = vstv %s376
    %v378 = vadd.f32 %v374, %v377
    %v379 = vadd.f32 %v375, %v377
    %s380 = sld [smem:[#allocation7 + $0x101]]
    %v381 = vstv %s380
    %v382 = vmul.f32 %v75, %v381
    %v383 = vmul.f32 %v77, %v381
    %v384 = vadd.f32 %v378, %v382
    %v385 = vadd.f32 %v379, %v383
    %s386 = sld [smem:[#allocation7 + $0x102]]
    %v387 = vstv %s386
    %v388 = vmul.f32 %v79, %v387
    %v389 = vmul.f32 %v81, %v387
    %v390 = vadd.f32 %v384, %v388
    %v391 = vadd.f32 %v385, %v389
    %s392 = sld [smem:[#allocation7 + $0x103]]
    %v393 = vstv %s392
    %v394 = vmul.f32 %v83, %v393
    %v395 = vmul.f32 %v85, %v393
    %v396 = vadd.f32 %v390, %v394
    %v397 = vadd.f32 %v391, %v395
    %v398 = vmax.f32 %v396, 0.0
    %v399 = vmax.f32 %v397, 0.0
    %s400 = scalar_lea.vmem [#allocation11], 2
    %401 = vst.msk [vmem:[%s400] ss:$4 sm:$0x3] %vm332, %v398
    %s402 = scalar_lea.vmem [#allocation11], 10
    %403 = vst.msk [vmem:[%s402] ss:$4 sm:$0x3] %vm332, %v399
    %v404 = vadd.f32 %v370, %v398
    %v405 = vadd.f32 %v371, %v399
    %s406 = sld [smem:[#allocation7 + $0x180]]
    %v407 = vstv %s406
    %v408 = vmul.f32 %v71, %v407
    %v409 = vmul.f32 %v73, %v407
    %s410 = sld [smem:[#allocation8 + $0x3]]
    %v411 = vstv %s410
    %v412 = vadd.f32 %v408, %v411
    %v413 = vadd.f32 %v409, %v411
    %s414 = sld [smem:[#allocation7 + $0x181]]
    %v415 = vstv %s414
    %v416 = vmul.f32 %v75, %v415
    %v417 = vmul.f32 %v77, %v415
    %v418 = vadd.f32 %v412, %v416
    %v419 = vadd.f32 %v413, %v417
    %s420 = sld [smem:[#allocation7 + $0x182]]
    %v421 = vstv %s420
    %v422 = vmul.f32 %v79, %v421
    %v423 = vmul.f32 %v81, %v421
    %v424 = vadd.f32 %v418, %v422
    %v425 = vadd.f32 %v419, %v423
    %s426 = sld [smem:[#allocation7 + $0x183]]
    %v427 = vstv %s426
    %v428 = vmul.f32 %v83, %v427
    %v429 = vmul.f32 %v85, %v427
    %v430 = vadd.f32 %v424, %v428
    %v431 = vadd.f32 %v425, %v429
    %v432 = vmax.f32 %v430, 0.0
    %v433 = vmax.f32 %v431, 0.0
    %s434 = scalar_lea.vmem [#allocation11], 3
    %435 = vst.msk [vmem:[%s434] ss:$4 sm:$0x3] %vm332, %v432
    %s436 = scalar_lea.vmem [#allocation11], 11
    %437 = vst.msk [vmem:[%s436] ss:$4 sm:$0x3] %vm332, %v433
    %v438 = vadd.f32 %v404, %v432
    %v439 = vadd.f32 %v405, %v433
    %440 = vst.msk [vmem:[#allocation14] sm:$0x3] %vm332, %v438
    %441 = vst.msk [vmem:[#allocation14 + $0x2] sm:$0x3] %vm332, %v439
    // Predicated region
    $region34: #{tpu_custom_call.1} parent=1 // pred_check
      _
    $region35: #{tpu_custom_call.1} parent=1 // pred_check_branch
      %443 = sbr.rel (0) target = $region37
    $region36: #{tpu_custom_call.1} parent=1 // pred_region
      %s445 = ssub.s32 256, 256
      %446 = vsyncadd [#allocation4], %s445
      %s447 = sshll.u32 [#allocation11], 4
      %s448 = int_to_ptr.vmem [resolvable:$true] %s447
      %453 = dma.vmem_to_hbm [thread:$0]  %s448, 256, %s4, [#allocation4], 128, 128, 8
    $region37: #{tpu_custom_call.1} parent=1 // pred_fallthru
      _
    // Predicated region
    $region38: #{tpu_custom_call.1} parent=1 // pred_check
      _
    $region39: #{tpu_custom_call.1} parent=1 // pred_check_branch
      %455 = sbr.rel (0) target = $region41
    $region40: #{tpu_custom_call.1} parent=1 // pred_region
      %s457 = ssub.s32 32, 32
      %458 = vsyncadd [#allocation13], %s457
      %s459 = sshll.u32 [#allocation12], 4
      %s460 = int_to_ptr.vmem [resolvable:$true] %s459
      %465 = dma.vmem_to_hbm [thread:$0]  %s460, 32, %s5, [#allocation13], 16, 16, 1
    $region41: #{tpu_custom_call.1} parent=1 // pred_fallthru
      _
    // Predicated region
    $region42: #{tpu_custom_call.1} parent=1 // pred_check
      _
    $region43: #{tpu_custom_call.1} parent=1 // pred_check_branch
      %467 = sbr.rel (0) target = $region45
    $region44: #{tpu_custom_call.1} parent=1 // pred_region
      %s469 = ssub.s32 64, 64
      %470 = vsyncadd [#allocation13], %s469
      %s471 = sshll.u32 [#allocation14], 4
      %s472 = int_to_ptr.vmem [resolvable:$true] %s471
      %477 = dma.vmem_to_hbm [thread:$0]  %s472, 64, %s6, [#allocation13], 32, 32, 2
    $region45: #{tpu_custom_call.1} parent=1 // pred_fallthru
      _
    // Predicated region
    $region46: #{tpu_custom_call.1} parent=1 // pred_check
      _
    $region47: #{tpu_custom_call.1} parent=1 // pred_check_branch
      %479 = sbr.rel (0) target = $region49
    $region48: #{tpu_custom_call.1} parent=1 // pred_region
      %480 = dma.done [#allocation4], 256
    $region49: #{tpu_custom_call.1} parent=1 // pred_fallthru
      _
    // Predicated region
    $region50: #{tpu_custom_call.1} parent=1 // pred_check
      _
    $region51: #{tpu_custom_call.1} parent=1 // pred_check_branch
      %482 = sbr.rel (0) target = $region53
    $region52: #{tpu_custom_call.1} parent=1 // pred_region
      %483 = dma.done [#allocation13], 32
    $region53: #{tpu_custom_call.1} parent=1 // pred_fallthru
      _
    // Predicated region
    $region54: #{tpu_custom_call.1} parent=1 // pred_check
      _
    $region55: #{tpu_custom_call.1} parent=1 // pred_check_branch
      %485 = sbr.rel (0) target = $region57
    $region56: #{tpu_custom_call.1} parent=1 // pred_region
      %486 = dma.done [#allocation13], 64
    $region57: #{tpu_custom_call.1} parent=1 // pred_fallthru
      _
    %487 = vsyncpa [#allocation3], 1
    %488 = vsyncpa [#allocation4], 1
    %489 = vsyncpa [#allocation13], 1
    %490 = vsyncpa [#allocation5], 1
    %491 = vsyncpa [#allocation6], 1
    %492 = vsyncpa [#allocation10], 1

</llo_original>
